<compile_context>
chip_gen: v7x
topology: tpu7x:2x2x1
jax: 0.10.0
libtpu: 0.0.40
codegen_flags: <defaults>
</compile_context>

<pallas_src>
import jax
import jax.numpy as jnp
from jax.experimental import pallas as pl
from jax.experimental.pallas import tpu as pltpu

_LANE = 128          # TPU vreg lane width
_EPS = 1e-5


# ---------------------------------------------------------------------------
# Kernels
# ---------------------------------------------------------------------------
def _ln_kernel(x_ref, gamma_ref, beta_ref, o_ref):
    """LayerNorm over the last dim of a (rows, H) tile (H = full hidden dim).

    Fused single pass: s1 = sum(x), s2 = sum(x*x) from the same loaded tile,
    var = E[x^2] - mean^2 (clamped at 0), all accumulation in f32.
    """
    x = x_ref[...].astype(jnp.float32)
    inv_h = jnp.float32(1.0 / x.shape[-1])
    s1 = jnp.sum(x, axis=-1, keepdims=True)
    s2 = jnp.sum(x * x, axis=-1, keepdims=True)
    mean = s1 * inv_h
    var = jnp.maximum(s2 * inv_h - mean * mean, 0.0)
    inv_std = jax.lax.rsqrt(var + _EPS)
    gamma = gamma_ref[...].astype(jnp.float32)
    beta = beta_ref[...].astype(jnp.float32)
    o_ref[...] = ((x - mean) * inv_std * gamma + beta).astype(o_ref.dtype)
    # TODO(synk): on v7x (3.2 TB/s HBM) profile whether the two XLU cross-lane
    # reductions bind; if so, move one reduction onto the MXU (x @ ones(H, 1))
    # so XLU and MXU each carry one reduction under the DMA.


def _ln_kernel_packed(x_ref, gamma_ref, beta_ref, p_ref, o_ref):
    """LayerNorm where G = 128 // H logical rows are packed per 128-lane row.

    x_ref is (rows, 128): each row holds G independent length-H segments, so
    loads/stores are full-width (no masked vst). P is the (128, 128)
    block-diagonal projector with entries 1/H inside each HxH diagonal block:
    x @ P and (x*x) @ P directly yield the per-segment mean / E[x^2] already
    broadcast to every lane of the segment (2 MXU matmuls total, exact).
    """
    x = x_ref[...].astype(jnp.float32)
    p = p_ref[...]                                           # (128, 128), f32
    mean_b = jnp.dot(x, p, preferred_element_type=jnp.float32)
    ex2_b = jnp.dot(x * x, p, preferred_element_type=jnp.float32)
    var_b = jnp.maximum(ex2_b - mean_b * mean_b, 0.0)
    inv_b = jax.lax.rsqrt(var_b + _EPS)
    gamma = gamma_ref[...].astype(jnp.float32)
    beta = beta_ref[...].astype(jnp.float32)
    o_ref[...] = ((x - mean_b) * inv_b * gamma + beta).astype(o_ref.dtype)
    # TODO(synk): if a bundle dump shows the (f32-emulated) MXU matmuls bind
    # below HBM roofline, replace them with a log2(H)-step pltpu.roll
    # shift-and-add butterfly (XLU + VPU) for the segmented reduce/broadcast.


# ---------------------------------------------------------------------------
# Tiling helpers
# ---------------------------------------------------------------------------
def _vmem_limit_bytes():
    """Scoped VMEM limit sized from the chip (64 MiB v7x, 128 MiB v5e/v6e)."""
    try:
        cap = int(pltpu.get_tpu_info().vmem_capacity_bytes)
    except Exception:
        cap = 64 * 1024 * 1024  # conservative: v7x physical VMEM
    return min(cap * 3 // 4, 96 * 1024 * 1024)


def _pick_row_tile(n_rows, lane_width, itemsize, vmem_limit):
    """Pick a row-tile height: sublane-aligned, VMEM-exact, bytes-capped."""
    # Sublane packing: 8 rows for 4-byte dtypes, 16 for bf16, 32 for int8.
    sub = max(8, 32 // itemsize)
    # Exact-ish VMEM per tile row:
    #   2x double-buffered input + 2x double-buffered output -> 4*itemsize B/lane
    #   f32 temporaries in the kernel (x_f32, x*x, f32 result) -> ~16 B/lane
    bytes_per_row = lane_width * (4 * itemsize + 16)
    # Bytes-based cap: ~8 MiB of input per buffer amortizes the ~0.35 us
    # per-grid-step overhead even at v7x HBM rates, and still fits the v7x
    # 48 MiB scoped budget under the accounting above (keep Buffered(2)).
    target_rows = (8 * 1024 * 1024) // (lane_width * itemsize)
    budget_rows = max(1, vmem_limit // bytes_per_row)
    tr = min(target_rows, budget_rows)
    tr = max(sub, (tr // sub) * sub)
    if tr >= n_rows:
        return n_rows, 1                     # single block equal to the full array
    return tr, pl.cdiv(n_rows, tr)
    # TODO(synk): extremely large H (a single row of `sub` sublanes overflowing
    # VMEM) would need a two-pass column-split variant; not needed for typical
    # hidden sizes.


# ---------------------------------------------------------------------------
# Wrapper
# ---------------------------------------------------------------------------
def my_layer_norm(x, gamma, beta):
    """x: (B, S, H); gamma, beta: (H,). Normalizes over dim=2 (PyTorch dims=2)."""
    B, S, H = x.shape
    R = B * S
    itemsize = jnp.dtype(x.dtype).itemsize
    vmem_limit = _vmem_limit_bytes()
    compiler_params = pltpu.CompilerParams(
        dimension_semantics=("parallel",),   # rows are independent
        vmem_limit_bytes=vmem_limit,
    )
    # TODO(synk): on v7x verify in the profile that the row axis actually
    # shards across both TensorCores; if one TC idles, switch this axis to
    # pltpu.CORE_PARALLEL (or an explicit leading grid axis of size num_cores).

    packable = (H < _LANE) and (_LANE % H == 0) and (R % (_LANE // H) == 0)

    if packable:
        # Lane-dense path: fold G = 128/H rows into each 128-wide row.
        G = _LANE // H
        R2 = R // G
        x2 = x.reshape(R2, _LANE)
        gamma2 = jnp.tile(gamma, G).reshape(1, _LANE)
        beta2 = jnp.tile(beta, G).reshape(1, _LANE)
        # Block-diagonal projector with 1/H folded in (power-of-two scale).
        seg = jnp.arange(_LANE) // H
        proj = (seg[:, None] == seg[None, :]).astype(jnp.float32) * jnp.float32(1.0 / H)

        tr, num_tiles = _pick_row_tile(R2, _LANE, itemsize, vmem_limit)
        out2 = pl.pallas_call(
            _ln_kernel_packed,
            out_shape=jax.ShapeDtypeStruct((R2, _LANE), x.dtype),
            grid=(num_tiles,),
            in_specs=[
                pl.BlockSpec((tr, _LANE), lambda i: (i, 0)),
                pl.BlockSpec((1, _LANE), lambda i: (0, 0)),
                pl.BlockSpec((1, _LANE), lambda i: (0, 0)),
                pl.BlockSpec((_LANE, _LANE), lambda i: (0, 0)),
            ],
            out_specs=pl.BlockSpec((tr, _LANE), lambda i: (i, 0)),
            compiler_params=compiler_params,
        )(x2, gamma2, beta2, proj)
        return out2.reshape(B, S, H)

    # General path: row-tiled grid over (R, H), full hidden dim per tile.
    # (For H that is a multiple of 128 this is already lane-dense; for small
    #  H not dividing 128 it accepts masked partial stores.)
    # TODO(synk): for small H that does not divide 128 (e.g. 96), an in-kernel
    # zero-padded packed variant would recover lane-dense stores.
    x2 = x.reshape(R, H)
    gamma2 = gamma.reshape(1, H)
    beta2 = beta.reshape(1, H)
    tr, num_tiles = _pick_row_tile(R, H, itemsize, vmem_limit)
    out2 = pl.pallas_call(
        _ln_kernel,
        out_shape=jax.ShapeDtypeStruct((R, H), x.dtype),
        grid=(num_tiles,),
        in_specs=[
            pl.BlockSpec((tr, H), lambda i: (i, 0)),
            pl.BlockSpec((1, H), lambda i: (0, 0)),
            pl.BlockSpec((1, H), lambda i: (0, 0)),
        ],
        out_specs=pl.BlockSpec((tr, H), lambda i: (i, 0)),
        compiler_params=compiler_params,
    )(x2, gamma2, beta2)
    return out2.reshape(B, S, H)


# ---------------------------------------------------------------------------
# Self-test
# ---------------------------------------------------------------------------
def _reference(x, gamma, beta):
    mean = jnp.mean(x, axis=2, keepdims=True)
    xs = x - mean
    var = jnp.mean(xs * xs, axis=2, keepdims=True)
    return gamma * xs * jax.lax.rsqrt(var + _EPS) + beta


if __name__ == "__main__":
    key = jax.random.PRNGKey(0)
    k1, k2 = jax.random.split(key)

    # Main case (matches the module's expected small 3-D input): packed path.
    B, S, H = 2, 8, 32
    x = jax.random.normal(k1, (B, S, H), dtype=jnp.float32)
    gamma = jnp.ones((H,), dtype=jnp.float32)   # module init: ones
    beta = jnp.ones((H,), dtype=jnp.float32)    # module init: ones (not zeros)

    out = jax.block_until_ready(my_layer_norm(x, gamma, beta))
    ref = _reference(x, gamma, beta)
    assert out.shape == (B, S, H)
    # Typical error ~1e-6; tolerance leaves headroom for reduction-order /
    # MXU f32 accumulation differences while still catching real precision bugs.
    assert jnp.allclose(out, ref, atol=1e-4, rtol=1e-4)

    # Secondary case exercising the general lane-dense path (H multiple of 128).
    B2, S2, H2 = 2, 8, 128
    x2 = jax.random.normal(k2, (B2, S2, H2), dtype=jnp.float32)
    gamma2 = jnp.ones((H2,), dtype=jnp.float32)
    beta2 = jnp.ones((H2,), dtype=jnp.float32)
    out2 = jax.block_until_ready(my_layer_norm(x2, gamma2, beta2))
    ref2 = _reference(x2, gamma2, beta2)
    assert out2.shape == (B2, S2, H2)
    assert jnp.allclose(out2, ref2, atol=1e-4, rtol=1e-4)

    print("KERNEL_OK")
</pallas_src>

<mosaic_0001>
module attributes {stable_mosaic.version = 11 : i64} {
  func.func @_ln_kernel_packed(%arg0: i32, %arg1: memref<4x128xf32, #tpu.memory_space<vmem>>, %arg2: memref<1x128xf32, #tpu.memory_space<vmem>>, %arg3: memref<1x128xf32, #tpu.memory_space<vmem>>, %arg4: memref<128x128xf32, #tpu.memory_space<vmem>>, %arg5: memref<4x128xf32, #tpu.memory_space<vmem>>) attributes {dimension_semantics = [#tpu.dimension_semantics<parallel>], iteration_bounds = array<i64: 1>, scalar_prefetch = 0 : i64, scratch_operands = 0 : i64, tpu.core_type = #tpu.core_type<tc>, window_params = [{transform_indices = @transform_0, window_bounds = array<i64: 4, 128>}, {pipeline_mode = #tpu.pipeline_mode<synchronous>, transform_indices = @transform_1, window_bounds = array<i64: 1, 128>}, {pipeline_mode = #tpu.pipeline_mode<synchronous>, transform_indices = @transform_2, window_bounds = array<i64: 1, 128>}, {pipeline_mode = #tpu.pipeline_mode<synchronous>, transform_indices = @transform_3, window_bounds = array<i64: 128, 128>}, {transform_indices = @transform_4, window_bounds = array<i64: 4, 128>}]} {
    %c0 = arith.constant 0 : index
    %c0_0 = arith.constant 0 : index
    %0 = vector.load %arg1[%c0, %c0_0] : memref<4x128xf32, #tpu.memory_space<vmem>>, vector<4x128xf32>
    %c0_1 = arith.constant 0 : index
    %c0_2 = arith.constant 0 : index
    %1 = vector.load %arg4[%c0_1, %c0_2] : memref<128x128xf32, #tpu.memory_space<vmem>>, vector<128x128xf32>
    %cst = arith.constant dense<0.000000e+00> : vector<4x128xf32>
    %2 = tpu.matmul %0, %1, %cst {dimension_numbers = #tpu.dot_dimension_numbers<[1], [0], [0], [1], [0, 0, 1, 1], [], []>} : vector<4x128xf32>, vector<128x128xf32>, vector<4x128xf32> -> vector<4x128xf32>
    %3 = arith.mulf %0, %0 : vector<4x128xf32>
    %cst_3 = arith.constant dense<0.000000e+00> : vector<4x128xf32>
    %4 = tpu.matmul %3, %1, %cst_3 {dimension_numbers = #tpu.dot_dimension_numbers<[1], [0], [0], [1], [0, 0, 1, 1], [], []>} : vector<4x128xf32>, vector<128x128xf32>, vector<4x128xf32> -> vector<4x128xf32>
    %5 = arith.mulf %2, %2 : vector<4x128xf32>
    %6 = arith.subf %4, %5 : vector<4x128xf32>
    %cst_4 = arith.constant 0.000000e+00 : f32
    %7 = vector.broadcast %cst_4 : f32 to vector<4x128xf32>
    %8 = arith.maximumf %6, %7 : vector<4x128xf32>
    %cst_5 = arith.constant 9.99999974E-6 : f32
    %9 = vector.broadcast %cst_5 : f32 to vector<4x128xf32>
    %10 = arith.addf %8, %9 : vector<4x128xf32>
    %11 = math.rsqrt %10 : vector<4x128xf32>
    %c0_6 = arith.constant 0 : index
    %c0_7 = arith.constant 0 : index
    %12 = vector.load %arg2[%c0_6, %c0_7] : memref<1x128xf32, #tpu.memory_space<vmem>>, vector<1x128xf32>
    %c0_8 = arith.constant 0 : index
    %c0_9 = arith.constant 0 : index
    %13 = vector.load %arg3[%c0_8, %c0_9] : memref<1x128xf32, #tpu.memory_space<vmem>>, vector<1x128xf32>
    %14 = arith.subf %0, %2 : vector<4x128xf32>
    %15 = arith.mulf %14, %11 : vector<4x128xf32>
    %16 = vector.broadcast %12 : vector<1x128xf32> to vector<4x128xf32>
    %17 = arith.mulf %15, %16 : vector<4x128xf32>
    %18 = vector.broadcast %13 : vector<1x128xf32> to vector<4x128xf32>
    %19 = arith.addf %17, %18 : vector<4x128xf32>
    %c0_10 = arith.constant 0 : index
    %c0_11 = arith.constant 0 : index
    %20 = vector.load %arg5[%c0_10, %c0_11] : memref<4x128xf32, #tpu.memory_space<vmem>>, vector<4x128xf32>
    tpu.vector_store %arg5[%c0_10, %c0_11], %19 {strides = array<i32>} : memref<4x128xf32, #tpu.memory_space<vmem>>, vector<4x128xf32>,
    return
  }
  func.func @transform_0(%arg0: i32) -> (i32, i32) {
    %c0_i32 = arith.constant 0 : i32
    %c0_i32_0 = arith.constant 0 : i32
    return %arg0, %c0_i32 : i32, i32
  }
  func.func @transform_1(%arg0: i32) -> (i32, i32) {
    %c0_i32 = arith.constant 0 : i32
    %c0_i32_0 = arith.constant 0 : i32
    %c0_i32_1 = arith.constant 0 : i32
    return %c0_i32, %c0_i32_0 : i32, i32
  }
  func.func @transform_2(%arg0: i32) -> (i32, i32) {
    %c0_i32 = arith.constant 0 : i32
    %c0_i32_0 = arith.constant 0 : i32
    %c0_i32_1 = arith.constant 0 : i32
    return %c0_i32, %c0_i32_0 : i32, i32
  }
  func.func @transform_3(%arg0: i32) -> (i32, i32) {
    %c0_i32 = arith.constant 0 : i32
    %c0_i32_0 = arith.constant 0 : i32
    %c0_i32_1 = arith.constant 0 : i32
    return %c0_i32, %c0_i32_0 : i32, i32
  }
  func.func @transform_4(%arg0: i32) -> (i32, i32) {
    %c0_i32 = arith.constant 0 : i32
    %c0_i32_0 = arith.constant 0 : i32
    return %arg0, %c0_i32 : i32, i32
  }
}

</mosaic_0001>

<llo_original>
// kernel: tpu_custom_call.1
$region0: #{tpu_custom_call.1}
  #allocation0 [shape = 'u32[]', space=smem, size = 0x4, offset = 0x4, fixed_abs, tag = 'smem constant byte address 0x4 - core index']
  #allocation1 [shape = 'u32[144,128]{1,0:T(1,128)}', space=vmem, size = 0x12000, scoped, tag = 'internal scratch']
  %s0 = inlined_call_operand.hbm [shape: f32[4,128], index: 0, kind: input, shape index: {}]
  %s1 = inlined_call_operand.vmem [shape: f32[1,128], index: 1, kind: input, shape index: {}]
  %s2 = inlined_call_operand.vmem [shape: f32[1,128], index: 2, kind: input, shape index: {}]
  %s3 = inlined_call_operand.hbm [shape: f32[128,128], index: 3, kind: input, shape index: {}]
  %s4 = inlined_call_operand.hbm [shape: f32[4,128], index: 4, kind: output, shape index: {}]
  %s5 = sld [smem:[#allocation0]]
  $region34: #{tpu_custom_call.1} parent=0
    _
  %s7 = ssub.s32 1, %s5
  %s8 = scalar_select 0, %s7, %s5
  $region1: #{tpu_custom_call.1} parent=0
    #allocation2 [shape = 'u8[2048]{0}', space=vmem, size = 0x800, scoped, tag = 'input window, operand 0, single buffered']
    #allocation3 [shape = 's32[1]{0}', space=sflag, size = 0x4, scoped, tag = 'scoped memory for tpu_custom_call.1']
    #allocation4 [shape = 's32[1]{0}', space=sflag, size = 0x4, scoped, tag = 'scoped memory for tpu_custom_call.1']
    #allocation5 [shape = 'u8[65536]{0}', space=vmem, size = 0x10000, scoped, tag = 'input window, operand 3, single buffered']
    #allocation6 [shape = 's32[1]{0}', space=sflag, size = 0x4, scoped, tag = 'scoped memory for tpu_custom_call.1']
    #allocation7 [shape = 'u8[2048]{0}', space=vmem, size = 0x800, scoped, tag = 'output window, operand 0, single buffered']
    %9 = vsyncpa [#allocation3], 0
    %10 = vsyncpa [#allocation6], 0
    %11 = vsyncpa [#allocation4], 0
    // Predicated region
    $region2: #{tpu_custom_call.1} parent=1 // pred_check
      _
    $region3: #{tpu_custom_call.1} parent=1 // pred_check_branch
      %13 = sbr.rel (0) target = $region5
    $region4: #{tpu_custom_call.1} parent=1 // pred_region
      %s15 = ssub.s32 64, 64
      %16 = vsyncadd [#allocation3], %s15
      %s18 = sshll.u32 [#allocation2], 4
      %s19 = int_to_ptr.vmem [resolvable:$true] %s18
      %21 = dma.hbm_to_vmem [thread:$0]  %s0, 64, %s19, [#allocation3]
    $region5: #{tpu_custom_call.1} parent=1 // pred_fallthru
      _
    // Predicated region
    $region6: #{tpu_custom_call.1} parent=1 // pred_check
      _
    $region7: #{tpu_custom_call.1} parent=1 // pred_check_branch
      %23 = sbr.rel (0) target = $region9
    $region8: #{tpu_custom_call.1} parent=1 // pred_region
      _
    $region9: #{tpu_custom_call.1} parent=1 // pred_fallthru
      _
    // Predicated region
    $region10: #{tpu_custom_call.1} parent=1 // pred_check
      _
    $region11: #{tpu_custom_call.1} parent=1 // pred_check_branch
      %25 = sbr.rel (0) target = $region13
    $region12: #{tpu_custom_call.1} parent=1 // pred_region
      _
    $region13: #{tpu_custom_call.1} parent=1 // pred_fallthru
      _
    // Predicated region
    $region14: #{tpu_custom_call.1} parent=1 // pred_check
      _
    $region15: #{tpu_custom_call.1} parent=1 // pred_check_branch
      %27 = sbr.rel (0) target = $region17
    $region16: #{tpu_custom_call.1} parent=1 // pred_region
      %s29 = ssub.s32 2048, 2048
      %30 = vsyncadd [#allocation6], %s29
      %s31 = sshll.u32 [#allocation5], 4
      %s32 = int_to_ptr.vmem [resolvable:$true] %s31
      %37 = dma.hbm_to_vmem [thread:$0]  %s3, 2048, %s32, [#allocation6], 128, 128, 8
    $region17: #{tpu_custom_call.1} parent=1 // pred_fallthru
      _
    // Predicated region
    $region18: #{tpu_custom_call.1} parent=1 // pred_check
      _
    $region19: #{tpu_custom_call.1} parent=1 // pred_check_branch
      %39 = sbr.rel (0) target = $region21
    $region20: #{tpu_custom_call.1} parent=1 // pred_region
      %40 = dma.done [#allocation3], 64
    $region21: #{tpu_custom_call.1} parent=1 // pred_fallthru
      _
    // Predicated region
    $region22: #{tpu_custom_call.1} parent=1 // pred_check
      _
    $region23: #{tpu_custom_call.1} parent=1 // pred_check_branch
      %42 = sbr.rel (0) target = $region25
    $region24: #{tpu_custom_call.1} parent=1 // pred_region
      %43 = dma.done [#allocation6], 2048
    $region25: #{tpu_custom_call.1} parent=1 // pred_fallthru
      _
    %v44 = vld [vmem:[#allocation2] sm:$0xf]
    %v45 = vld [vmem:[#allocation5] sm:$0xff]
    %v46 = vld [vmem:[#allocation5 + $0x8] sm:$0xff]
    %v47 = vld [vmem:[#allocation5 + $0x10] sm:$0xff]
    %v48 = vld [vmem:[#allocation5 + $0x18] sm:$0xff]
    %v49 = vld [vmem:[#allocation5 + $0x20] sm:$0xff]
    %v50 = vld [vmem:[#allocation5 + $0x28] sm:$0xff]
    %v51 = vld [vmem:[#allocation5 + $0x30] sm:$0xff]
    %v52 = vld [vmem:[#allocation5 + $0x38] sm:$0xff]
    %v53 = vld [vmem:[#allocation5 + $0x40] sm:$0xff]
    %v54 = vld [vmem:[#allocation5 + $0x48] sm:$0xff]
    %v55 = vld [vmem:[#allocation5 + $0x50] sm:$0xff]
    %v56 = vld [vmem:[#allocation5 + $0x58] sm:$0xff]
    %v57 = vld [vmem:[#allocation5 + $0x60] sm:$0xff]
    %v58 = vld [vmem:[#allocation5 + $0x68] sm:$0xff]
    %v59 = vld [vmem:[#allocation5 + $0x70] sm:$0xff]
    %v60 = vld [vmem:[#allocation5 + $0x78] sm:$0xff]
    %61 = vmatprep.subr.mxu0 0.0
    %62 = vmatpush1.msra.mxu0 %v45
    %63 = vmatprep.subr.mxu0 0.0
    %64 = vmatpush1.msra.mxu0 %v46
    %65 = vmatprep.subr.mxu0 0.0
    %66 = vmatpush1.msra.mxu0 %v47
    %67 = vmatprep.subr.mxu0 0.0
    %68 = vmatpush1.msra.mxu0 %v48
    %69 = vmatprep.subr.mxu0 0.0
    %70 = vmatpush1.msra.mxu0 %v49
    %71 = vmatprep.subr.mxu0 0.0
    %72 = vmatpush1.msra.mxu0 %v50
    %73 = vmatprep.subr.mxu0 0.0
    %74 = vmatpush1.msra.mxu0 %v51
    %75 = vmatprep.subr.mxu0 0.0
    %76 = vmatpush1.msra.mxu0 %v52
    %77 = vmatprep.subr.mxu0 0.0
    %78 = vmatpush1.msra.mxu0 %v53
    %79 = vmatprep.subr.mxu0 0.0
    %80 = vmatpush1.msra.mxu0 %v54
    %81 = vmatprep.subr.mxu0 0.0
    %82 = vmatpush1.msra.mxu0 %v55
    %83 = vmatprep.subr.mxu0 0.0
    %84 = vmatpush1.msra.mxu0 %v56
    %85 = vmatprep.subr.mxu0 0.0
    %86 = vmatpush1.msra.mxu0 %v57
    %87 = vmatprep.subr.mxu0 0.0
    %88 = vmatpush1.msra.mxu0 %v58
    %89 = vmatprep.subr.mxu0 0.0
    %90 = vmatpush1.msra.mxu0 %v59
    %91 = vmatprep.subr.mxu0 0.0
    %92 = vmatpush1.msra.mxu0 %v60
    %93 = vmatprep.subr.mxu0 0.0
    %94 = vmatpush1.msra.mxu0 0.0
    %95 = vmatprep.subr.mxu0 0.0
    %96 = vmatpush1.msra.mxu0 0.0
    %97 = vmatprep.subr.mxu0 0.0
    %98 = vmatpush1.msra.mxu0 0.0
    %99 = vmatprep.subr.mxu0 0.0
    %100 = vmatpush1.msra.mxu0 0.0
    %101 = vmatprep.subr.mxu0 0.0
    %102 = vmatpush1.msra.mxu0 0.0
    %103 = vmatprep.subr.mxu0 0.0
    %104 = vmatpush1.msra.mxu0 0.0
    %105 = vmatprep.subr.mxu0 0.0
    %106 = vmatpush1.msra.mxu0 0.0
    %107 = vmatprep.subr.mxu0 0.0
    %108 = vmatpush1.msra.mxu0 0.0
    %109 = vmatprep.subr.mxu0 0.0
    %110 = vmatpush1.msra.mxu0 0.0
    %111 = vmatprep.subr.mxu0 0.0
    %112 = vmatpush1.msra.mxu0 0.0
    %113 = vmatprep.subr.mxu0 0.0
    %114 = vmatpush1.msra.mxu0 0.0
    %115 = vmatprep.subr.mxu0 0.0
    %116 = vmatpush1.msra.mxu0 0.0
    %117 = vmatprep.subr.mxu0 0.0
    %118 = vmatpush1.msra.mxu0 0.0
    %119 = vmatprep.subr.mxu0 0.0
    %120 = vmatpush1.msra.mxu0 0.0
    %121 = vmatprep.subr.mxu0 0.0
    %122 = vmatpush1.msra.mxu0 0.0
    %123 = vmatprep.subr.mxu0 0.0
    %124 = vmatpush1.msra.mxu0 0.0
    %125 = vmatprep.mubr.f32.mxu0 0.0
    %126 = vmatmul.mubr.f32.gmra.mrb[0].mxu0 %v44
    %v127 = vpop.f32.mrb[0].mxu0
    %v128 = vadd.f32 0.0, %v127
    %v129 = vpop.f32.mrb[0].mxu0
    %130 = vdwg.mxu0
    %v131 = vmul.f32 %v44, %v44
    %132 = vmatprep.subr.mxu0 0.0
    %133 = vmatpush1.msra.mxu0 %v45
    %134 = vmatprep.subr.mxu0 0.0
    %135 = vmatpush1.msra.mxu0 %v46
    %136 = vmatprep.subr.mxu0 0.0
    %137 = vmatpush1.msra.mxu0 %v47
    %138 = vmatprep.subr.mxu0 0.0
    %139 = vmatpush1.msra.mxu0 %v48
    %140 = vmatprep.subr.mxu0 0.0
    %141 = vmatpush1.msra.mxu0 %v49
    %142 = vmatprep.subr.mxu0 0.0
    %143 = vmatpush1.msra.mxu0 %v50
    %144 = vmatprep.subr.mxu0 0.0
    %145 = vmatpush1.msra.mxu0 %v51
    %146 = vmatprep.subr.mxu0 0.0
    %147 = vmatpush1.msra.mxu0 %v52
    %148 = vmatprep.subr.mxu0 0.0
    %149 = vmatpush1.msra.mxu0 %v53
    %150 = vmatprep.subr.mxu0 0.0
    %151 = vmatpush1.msra.mxu0 %v54
    %152 = vmatprep.subr.mxu0 0.0
    %153 = vmatpush1.msra.mxu0 %v55
    %154 = vmatprep.subr.mxu0 0.0
    %155 = vmatpush1.msra.mxu0 %v56
    %156 = vmatprep.subr.mxu0 0.0
    %157 = vmatpush1.msra.mxu0 %v57
    %158 = vmatprep.subr.mxu0 0.0
    %159 = vmatpush1.msra.mxu0 %v58
    %160 = vmatprep.subr.mxu0 0.0
    %161 = vmatpush1.msra.mxu0 %v59
    %162 = vmatprep.subr.mxu0 0.0
    %163 = vmatpush1.msra.mxu0 %v60
    %164 = vmatprep.subr.mxu0 0.0
    %165 = vmatpush1.msra.mxu0 0.0
    %166 = vmatprep.subr.mxu0 0.0
    %167 = vmatpush1.msra.mxu0 0.0
    %168 = vmatprep.subr.mxu0 0.0
    %169 = vmatpush1.msra.mxu0 0.0
    %170 = vmatprep.subr.mxu0 0.0
    %171 = vmatpush1.msra.mxu0 0.0
    %172 = vmatprep.subr.mxu0 0.0
    %173 = vmatpush1.msra.mxu0 0.0
    %174 = vmatprep.subr.mxu0 0.0
    %175 = vmatpush1.msra.mxu0 0.0
    %176 = vmatprep.subr.mxu0 0.0
    %177 = vmatpush1.msra.mxu0 0.0
    %178 = vmatprep.subr.mxu0 0.0
    %179 = vmatpush1.msra.mxu0 0.0
    %180 = vmatprep.subr.mxu0 0.0
    %181 = vmatpush1.msra.mxu0 0.0
    %182 = vmatprep.subr.mxu0 0.0
    %183 = vmatpush1.msra.mxu0 0.0
    %184 = vmatprep.subr.mxu0 0.0
    %185 = vmatpush1.msra.mxu0 0.0
    %186 = vmatprep.subr.mxu0 0.0
    %187 = vmatpush1.msra.mxu0 0.0
    %188 = vmatprep.subr.mxu0 0.0
    %189 = vmatpush1.msra.mxu0 0.0
    %190 = vmatprep.subr.mxu0 0.0
    %191 = vmatpush1.msra.mxu0 0.0
    %192 = vmatprep.subr.mxu0 0.0
    %193 = vmatpush1.msra.mxu0 0.0
    %194 = vmatprep.subr.mxu0 0.0
    %195 = vmatpush1.msra.mxu0 0.0
    %196 = vmatprep.mubr.f32.mxu0 0.0
    %197 = vmatmul.mubr.f32.gmra.mrb[0].mxu0 %v131
    %v198 = vpop.f32.mrb[0].mxu0
    %v199 = vadd.f32 0.0, %v198
    %v200 = vpop.f32.mrb[0].mxu0
    %201 = vdwg.mxu0
    %v202 = vmul.f32 %v128, %v128
    %v203 = vsub.f32 %v199, %v202
    %v204 = vmax.f32 %v203, 0.0
    %v205 = vadd.f32 %v204, 1e-05
    %v206 = vrsqrt.pop %v205
    %v207 = vld [vmem:[%s1] sm:$0x1]
    %v208 = vld [vmem:[%s2] sm:$0x1]
    %v209 = vsub.f32 %v44, %v128
    %v210 = vmul.f32 %v209, %v206
    %v212 = vlaneseq
    %v213 = vshrl.u32 %v212, 7
    %v214 = vsub.s32 0, %v213
    %v215 = vrot.slane %v207, %v214
    %v217 = vmul.f32 %v210, %v215
    %v219 = vlaneseq
    %v220 = vshrl.u32 %v219, 7
    %v221 = vsub.s32 0, %v220
    %v222 = vrot.slane %v208, %v221
    %v224 = vadd.f32 %v217, %v222
    %225 = vst [vmem:[#allocation7] sm:$0xf] %v224
    // Predicated region
    $region26: #{tpu_custom_call.1} parent=1 // pred_check
      _
    $region27: #{tpu_custom_call.1} parent=1 // pred_check_branch
      %227 = sbr.rel (0) target = $region29
    $region28: #{tpu_custom_call.1} parent=1 // pred_region
      %s229 = ssub.s32 64, 64
      %230 = vsyncadd [#allocation4], %s229
      %s232 = sshll.u32 [#allocation7], 4
      %s233 = int_to_ptr.vmem [resolvable:$true] %s232
      %235 = dma.vmem_to_hbm [thread:$0]  %s233, 64, %s4, [#allocation4]
    $region29: #{tpu_custom_call.1} parent=1 // pred_fallthru
      _
    // Predicated region
    $region30: #{tpu_custom_call.1} parent=1 // pred_check
      _
    $region31: #{tpu_custom_call.1} parent=1 // pred_check_branch
      %237 = sbr.rel (0) target = $region33
    $region32: #{tpu_custom_call.1} parent=1 // pred_region
      %238 = dma.done [#allocation4], 64
    $region33: #{tpu_custom_call.1} parent=1 // pred_fallthru
      _
    %239 = vsyncpa [#allocation3], 1
    %240 = vsyncpa [#allocation6], 1
    %241 = vsyncpa [#allocation4], 1

</llo_original>
